<compile_context>
chip_gen: v6e
topology: v6e:2x2x1
jax: 0.10.0
libtpu: 0.0.40
codegen_flags: <defaults>
</compile_context>

<pallas_src>
import functools

import numpy as np
import jax
import jax.numpy as jnp
from jax.experimental import pallas as pl
from jax.experimental.pallas import tpu as pltpu

LANES = 128


# ----------------------------- Pallas kernel ------------------------------ #

def _combine(a, b, e):
    """Lukasiewicz min-uninorm, vectorized over (..., lanes).

    Equivalent to the PyTorch masked branches for a, b in [0,1], e in [0,1]:
      both <= e : e * max(0, a/e + b/e - 1)                     == max(0, a+b-e)
      both >= e : e + (1-e)*min(1, (a-e)/(1-e) + (b-e)/(1-e))   == min(1, a+b-e)
      mixed     : min(a, b)
    Since a+b-e >= e when both >= e and <= e when both <= e, the two clamp
    branches collapse into one clip.  Ties (a==e or b==e) land in the clip
    branch, matching the reference's mask write order.  Division-free, so no
    div-by-zero hazard (and padded lanes with e=0, x=0 stay exactly 0).
    """
    s = a + b - e
    mixed = (a - e) * (b - e) < 0.0
    return jnp.where(mixed, jnp.minimum(a, b), jnp.clip(s, 0.0, 1.0))


def _uninorm_kernel(x_ref, neutral_ref, wt_ref, bias_ref, out_ref, *, n):
    # x_ref: (n, B, Pp); neutral_ref / bias_ref: (1, Pp);
    # wt_ref: (Pp, Pp) = padded W^T; out_ref: (B, Pp).
    e2 = neutral_ref[...]                       # (1, Pp)
    cur = x_ref[...]                            # (n, B, Pp)

    if n > 1 and (n & (n - 1)) == 0:
        # Power-of-two n: fold adjacent row pairs level-by-level.  Adjacent
        # pairing at every level reproduces the original first-half /
        # second-half recursion tree bit-exactly.  The reshape only splits the
        # untiled leading dim, so it is layout-free.
        e3 = e2[None]                           # (1, 1, Pp)
        while cur.shape[0] > 1:
            m, B, Pp = cur.shape
            pairs = cur.reshape(m // 2, 2, B, Pp)
            cur = _combine(pairs[:, 0], pairs[:, 1], e3)
        v = cur[0]                              # (B, Pp)
    else:
        # General n: statically unrolled recursion mirroring the reference.
        def tree(lo, hi):
            if hi - lo == 1:
                return cur[lo]                  # (B, Pp)
            half = (hi - lo) // 2
            return _combine(tree(lo, lo + half), tree(lo + half, hi), e2)

        v = tree(0, n)                          # (B, Pp)

    # fc: out = v @ W^T + b  (wt_ref already holds the padded W^T)
    out_ref[...] = (
        jnp.dot(v, wt_ref[...], preferred_element_type=jnp.float32)
        + bias_ref[...]
    )


# ------------------------------ JAX wrapper ------------------------------- #

def _forward(x, neutral_p, wt_p, b_p, *, normalize_neutral):
    x = jnp.asarray(x, jnp.float32)
    squeeze = x.ndim == 2
    if squeeze:
        x = x[None]                             # (1, P, n)
    B, P, n = x.shape
    Pp = wt_p.shape[0]

    e = neutral_p / n if normalize_neutral else neutral_p      # (1, Pp)

    # Single fused transpose+pad to the kernel layout (n, B, Pp): aggregation
    # axis outermost, num_params lane-dense (unmasked VPU ops and stores; the
    # fc matmul is (B,128)@(128,128) on the MXU).  Padded lanes carry zeros
    # and are nulled by the zero weight columns.
    x_k = jnp.transpose(x, (2, 0, 1))                          # (n, B, P)
    x_k = jnp.pad(x_k, ((0, 0), (0, 0), (0, Pp - P)))

    out = pl.pallas_call(
        functools.partial(_uninorm_kernel, n=n),
        out_shape=jax.ShapeDtypeStruct((B, Pp), jnp.float32),
        grid_spec=pl.GridSpec(
            grid=(1,),
            in_specs=[
                pl.BlockSpec((n, B, Pp), lambda i: (0, 0, 0)),
                pl.BlockSpec((1, Pp), lambda i: (0, 0)),
                pl.BlockSpec((Pp, Pp), lambda i: (0, 0)),
                pl.BlockSpec((1, Pp), lambda i: (0, 0)),
            ],
            out_specs=pl.BlockSpec((B, Pp), lambda i: (0, 0)),
        ),
        compiler_params=pltpu.CompilerParams(
            dimension_semantics=("arbitrary",)),
    )(x_k, e, wt_p, b_p)

    out = out[:, :P]
    return out[0] if squeeze else out


class UninormAggregatorPallas:
    """Pallas port of UninormAggregator('lukasiewicz', off_diagonal='min').

    Static parameter prep (transpose+pad W^T, pad bias/neutral to a 128-lane
    multiple) happens once here; __call__ is a jitted fusion + one pallas_call.
    Accepts x of shape (num_params, n) or batched (B, num_params, n).
    """

    def __init__(self, num_params, neutral, fc_w, fc_b, *, normalize_neutral=False):
        P = num_params
        Pp = ((P + LANES - 1) // LANES) * LANES
        self.num_params = P
        self.padded = Pp
        # Padding must stay exactly zero so padded lanes contribute nothing.
        self.wt_p = jnp.pad(jnp.asarray(fc_w, jnp.float32).T,
                            ((0, Pp - P), (0, Pp - P)))
        self.b_p = jnp.pad(jnp.asarray(fc_b, jnp.float32).reshape(1, P),
                           ((0, 0), (0, Pp - P)))
        self.neutral_p = jnp.pad(jnp.asarray(neutral, jnp.float32).reshape(1, P),
                                 ((0, 0), (0, Pp - P)))
        self._fwd = jax.jit(functools.partial(
            _forward, normalize_neutral=normalize_neutral))

    def __call__(self, x):
        return self._fwd(x, self.neutral_p, self.wt_p, self.b_p)


# --------------------------- numpy reference ------------------------------ #
# Uses the *original* (division-based) PyTorch formulation to validate the
# simplified kernel against the true module semantics.

def _ref_min_uninorm(a, b, e):
    y = np.zeros_like(a)
    m00 = (a <= e) & (b <= e)
    if m00.any():
        e0 = e[m00]
        y[m00] = e0 * np.maximum(0.0, a[m00] / e0 + b[m00] / e0 - 1.0)
    m11 = (a >= e) & (b >= e)
    if m11.any():
        e1 = e[m11]
        y[m11] = e1 + (1.0 - e1) * np.minimum(
            1.0, (a[m11] - e1) / (1.0 - e1) + (b[m11] - e1) / (1.0 - e1))
    mxx = ((a > e) & (b < e)) | ((a < e) & (b > e))
    if mxx.any():
        y[mxx] = np.minimum(a[mxx], b[mxx])
    return y


def _ref_uninorm(x, e):
    n = x.shape[1]
    if n == 1:
        return x[:, 0]
    if n == 2:
        return _ref_min_uninorm(x[:, 0], x[:, 1], e)
    half = n // 2
    return _ref_min_uninorm(_ref_uninorm(x[:, :half], e),
                            _ref_uninorm(x[:, half:], e), e)


def _ref_forward(x, neutral, W, b):
    return W @ _ref_uninorm(x, neutral) + b


# --------------------------------- main ------------------------------------ #

if __name__ == "__main__":
    num_params, n, batch = 32, 8, 4

    key = jax.random.PRNGKey(0)
    kx, kxb, kw, kbias = jax.random.split(key, 4)

    # Fuzzy truth values in [0, 1); neutral strictly inside (0, 1) so every
    # uninorm branch is exercised and the division-free combine is exactly
    # equivalent to the original formulas.
    x_single = jax.random.uniform(kx, (num_params, n), dtype=jnp.float32)
    x_batch = jax.random.uniform(kxb, (batch, num_params, n), dtype=jnp.float32)
    neutral = jnp.linspace(0.2, 0.8, num_params, dtype=jnp.float32)
    bound = 1.0 / np.sqrt(num_params)
    fc_w = jax.random.uniform(kw, (num_params, num_params),
                              minval=-bound, maxval=bound, dtype=jnp.float32)
    fc_b = jax.random.uniform(kbias, (num_params,),
                              minval=-bound, maxval=bound, dtype=jnp.float32)

    mod = UninormAggregatorPallas(num_params, neutral, fc_w, fc_b,
                                  normalize_neutral=False)

    out_single = jax.block_until_ready(mod(x_single))      # (num_params,)
    out_batch = jax.block_until_ready(mod(x_batch))        # (batch, num_params)

    ref_single = _ref_forward(np.asarray(x_single), np.asarray(neutral),
                              np.asarray(fc_w), np.asarray(fc_b))
    ref_batch = np.stack([
        _ref_forward(xb, np.asarray(neutral), np.asarray(fc_w), np.asarray(fc_b))
        for xb in np.asarray(x_batch)
    ])

    np.testing.assert_allclose(np.asarray(out_single), ref_single,
                               rtol=1e-5, atol=1e-5)
    np.testing.assert_allclose(np.asarray(out_batch), ref_batch,
                               rtol=1e-5, atol=1e-5)
    print("KERNEL_OK")
</pallas_src>

<mosaic_0001>
module attributes {stable_mosaic.version = 11 : i64} {
  func.func @_uninorm_kernel(%arg0: i32, %arg1: memref<8x1x128xf32, #tpu.memory_space<vmem>>, %arg2: memref<1x128xf32, #tpu.memory_space<vmem>>, %arg3: memref<128x128xf32, #tpu.memory_space<vmem>>, %arg4: memref<1x128xf32, #tpu.memory_space<vmem>>, %arg5: memref<1x128xf32, #tpu.memory_space<vmem>>) attributes {dimension_semantics = [#tpu.dimension_semantics<arbitrary>], iteration_bounds = array<i64: 1>, scalar_prefetch = 0 : i64, scratch_operands = 0 : i64, tpu.core_type = #tpu.core_type<tc>, window_params = [{pipeline_mode = #tpu.pipeline_mode<synchronous>, transform_indices = @transform_0, window_bounds = array<i64: 8, 1, 128>}, {pipeline_mode = #tpu.pipeline_mode<synchronous>, transform_indices = @transform_1, window_bounds = array<i64: 1, 128>}, {pipeline_mode = #tpu.pipeline_mode<synchronous>, transform_indices = @transform_2, window_bounds = array<i64: 128, 128>}, {pipeline_mode = #tpu.pipeline_mode<synchronous>, transform_indices = @transform_3, window_bounds = array<i64: 1, 128>}, {pipeline_mode = #tpu.pipeline_mode<synchronous>, transform_indices = @transform_4, window_bounds = array<i64: 1, 128>}]} {
    %c0 = arith.constant 0 : index
    %c0_0 = arith.constant 0 : index
    %0 = vector.load %arg2[%c0, %c0_0] : memref<1x128xf32, #tpu.memory_space<vmem>>, vector<1x128xf32>
    %c0_1 = arith.constant 0 : index
    %c0_2 = arith.constant 0 : index
    %c0_3 = arith.constant 0 : index
    %1 = vector.load %arg1[%c0_1, %c0_2, %c0_3] : memref<8x1x128xf32, #tpu.memory_space<vmem>>, vector<8x1x128xf32>
    %2 = vector.shape_cast %0 : vector<1x128xf32> to vector<1x1x128xf32>
    %3 = vector.shape_cast %1 : vector<8x1x128xf32> to vector<4x2x1x128xf32>
    %4 = vector.extract_strided_slice %3 {offsets = [0, 0, 0, 0], sizes = [4, 1, 1, 128], strides = [1, 1, 1, 1]} : vector<4x2x1x128xf32> to vector<4x1x1x128xf32>
    %5 = vector.shape_cast %4 : vector<4x1x1x128xf32> to vector<4x1x128xf32>
    %6 = vector.extract_strided_slice %3 {offsets = [0, 1, 0, 0], sizes = [4, 1, 1, 128], strides = [1, 1, 1, 1]} : vector<4x2x1x128xf32> to vector<4x1x1x128xf32>
    %7 = vector.shape_cast %6 : vector<4x1x1x128xf32> to vector<4x1x128xf32>
    %8 = arith.addf %5, %7 : vector<4x1x128xf32>
    %9 = vector.broadcast %2 : vector<1x1x128xf32> to vector<4x1x128xf32>
    %10 = arith.subf %8, %9 : vector<4x1x128xf32>
    %11 = vector.broadcast %2 : vector<1x1x128xf32> to vector<4x1x128xf32>
    %12 = arith.subf %5, %11 : vector<4x1x128xf32>
    %13 = vector.broadcast %2 : vector<1x1x128xf32> to vector<4x1x128xf32>
    %14 = arith.subf %7, %13 : vector<4x1x128xf32>
    %15 = arith.mulf %12, %14 : vector<4x1x128xf32>
    %cst = arith.constant 0.000000e+00 : f32
    %16 = vector.broadcast %cst : f32 to vector<4x1x128xf32>
    %17 = arith.cmpf olt, %15, %16 : vector<4x1x128xf32>
    %18 = arith.minimumf %5, %7 : vector<4x1x128xf32>
    %cst_4 = arith.constant 0.000000e+00 : f32
    %cst_5 = arith.constant 1.000000e+00 : f32
    %19 = vector.broadcast %cst_4 : f32 to vector<4x1x128xf32>
    %20 = arith.maximumf %19, %10 : vector<4x1x128xf32>
    %21 = vector.broadcast %cst_5 : f32 to vector<4x1x128xf32>
    %22 = arith.minimumf %21, %20 : vector<4x1x128xf32>
    %23 = arith.select %17, %18, %22 : vector<4x1x128xi1>, vector<4x1x128xf32>
    %24 = vector.shape_cast %23 : vector<4x1x128xf32> to vector<2x2x1x128xf32>
    %25 = vector.extract_strided_slice %24 {offsets = [0, 0, 0, 0], sizes = [2, 1, 1, 128], strides = [1, 1, 1, 1]} : vector<2x2x1x128xf32> to vector<2x1x1x128xf32>
    %26 = vector.shape_cast %25 : vector<2x1x1x128xf32> to vector<2x1x128xf32>
    %27 = vector.extract_strided_slice %24 {offsets = [0, 1, 0, 0], sizes = [2, 1, 1, 128], strides = [1, 1, 1, 1]} : vector<2x2x1x128xf32> to vector<2x1x1x128xf32>
    %28 = vector.shape_cast %27 : vector<2x1x1x128xf32> to vector<2x1x128xf32>
    %29 = arith.addf %26, %28 : vector<2x1x128xf32>
    %30 = vector.broadcast %2 : vector<1x1x128xf32> to vector<2x1x128xf32>
    %31 = arith.subf %29, %30 : vector<2x1x128xf32>
    %32 = vector.broadcast %2 : vector<1x1x128xf32> to vector<2x1x128xf32>
    %33 = arith.subf %26, %32 : vector<2x1x128xf32>
    %34 = vector.broadcast %2 : vector<1x1x128xf32> to vector<2x1x128xf32>
    %35 = arith.subf %28, %34 : vector<2x1x128xf32>
    %36 = arith.mulf %33, %35 : vector<2x1x128xf32>
    %cst_6 = arith.constant 0.000000e+00 : f32
    %37 = vector.broadcast %cst_6 : f32 to vector<2x1x128xf32>
    %38 = arith.cmpf olt, %36, %37 : vector<2x1x128xf32>
    %39 = arith.minimumf %26, %28 : vector<2x1x128xf32>
    %cst_7 = arith.constant 0.000000e+00 : f32
    %cst_8 = arith.constant 1.000000e+00 : f32
    %40 = vector.broadcast %cst_7 : f32 to vector<2x1x128xf32>
    %41 = arith.maximumf %40, %31 : vector<2x1x128xf32>
    %42 = vector.broadcast %cst_8 : f32 to vector<2x1x128xf32>
    %43 = arith.minimumf %42, %41 : vector<2x1x128xf32>
    %44 = arith.select %38, %39, %43 : vector<2x1x128xi1>, vector<2x1x128xf32>
    %45 = vector.shape_cast %44 : vector<2x1x128xf32> to vector<1x2x1x128xf32>
    %46 = vector.extract_strided_slice %45 {offsets = [0, 0, 0, 0], sizes = [1, 1, 1, 128], strides = [1, 1, 1, 1]} : vector<1x2x1x128xf32> to vector<1x1x1x128xf32>
    %47 = vector.shape_cast %46 : vector<1x1x1x128xf32> to vector<1x1x128xf32>
    %48 = vector.extract_strided_slice %45 {offsets = [0, 1, 0, 0], sizes = [1, 1, 1, 128], strides = [1, 1, 1, 1]} : vector<1x2x1x128xf32> to vector<1x1x1x128xf32>
    %49 = vector.shape_cast %48 : vector<1x1x1x128xf32> to vector<1x1x128xf32>
    %50 = arith.addf %47, %49 : vector<1x1x128xf32>
    %51 = arith.subf %50, %2 : vector<1x1x128xf32>
    %52 = arith.subf %47, %2 : vector<1x1x128xf32>
    %53 = arith.subf %49, %2 : vector<1x1x128xf32>
    %54 = arith.mulf %52, %53 : vector<1x1x128xf32>
    %cst_9 = arith.constant 0.000000e+00 : f32
    %55 = vector.broadcast %cst_9 : f32 to vector<1x1x128xf32>
    %56 = arith.cmpf olt, %54, %55 : vector<1x1x128xf32>
    %57 = arith.minimumf %47, %49 : vector<1x1x128xf32>
    %cst_10 = arith.constant 0.000000e+00 : f32
    %cst_11 = arith.constant 1.000000e+00 : f32
    %58 = vector.broadcast %cst_10 : f32 to vector<1x1x128xf32>
    %59 = arith.maximumf %58, %51 : vector<1x1x128xf32>
    %60 = vector.broadcast %cst_11 : f32 to vector<1x1x128xf32>
    %61 = arith.minimumf %60, %59 : vector<1x1x128xf32>
    %62 = arith.select %56, %57, %61 : vector<1x1x128xi1>, vector<1x1x128xf32>
    %63 = vector.shape_cast %62 : vector<1x1x128xf32> to vector<1x128xf32>
    %c0_12 = arith.constant 0 : index
    %c0_13 = arith.constant 0 : index
    %64 = vector.load %arg3[%c0_12, %c0_13] : memref<128x128xf32, #tpu.memory_space<vmem>>, vector<128x128xf32>
    %cst_14 = arith.constant dense<0.000000e+00> : vector<1x128xf32>
    %65 = tpu.matmul %63, %64, %cst_14 {dimension_numbers = #tpu.dot_dimension_numbers<[1], [0], [0], [1], [0, 0, 1, 1], [], []>} : vector<1x128xf32>, vector<128x128xf32>, vector<1x128xf32> -> vector<1x128xf32>
    %c0_15 = arith.constant 0 : index
    %c0_16 = arith.constant 0 : index
    %66 = vector.load %arg4[%c0_15, %c0_16] : memref<1x128xf32, #tpu.memory_space<vmem>>, vector<1x128xf32>
    %67 = arith.addf %65, %66 : vector<1x128xf32>
    %c0_17 = arith.constant 0 : index
    %c0_18 = arith.constant 0 : index
    %68 = vector.load %arg5[%c0_17, %c0_18] : memref<1x128xf32, #tpu.memory_space<vmem>>, vector<1x128xf32>
    tpu.vector_store %arg5[%c0_17, %c0_18], %67 {strides = array<i32>} : memref<1x128xf32, #tpu.memory_space<vmem>>, vector<1x128xf32>,
    return
  }
  func.func @transform_0(%arg0: i32) -> (i32, i32, i32) {
    %c0_i32 = arith.constant 0 : i32
    %c0_i32_0 = arith.constant 0 : i32
    %c0_i32_1 = arith.constant 0 : i32
    %c0_i32_2 = arith.constant 0 : i32
    return %c0_i32, %c0_i32_0, %c0_i32_1 : i32, i32, i32
  }
  func.func @transform_1(%arg0: i32) -> (i32, i32) {
    %c0_i32 = arith.constant 0 : i32
    %c0_i32_0 = arith.constant 0 : i32
    %c0_i32_1 = arith.constant 0 : i32
    return %c0_i32, %c0_i32_0 : i32, i32
  }
  func.func @transform_2(%arg0: i32) -> (i32, i32) {
    %c0_i32 = arith.constant 0 : i32
    %c0_i32_0 = arith.constant 0 : i32
    %c0_i32_1 = arith.constant 0 : i32
    return %c0_i32, %c0_i32_0 : i32, i32
  }
  func.func @transform_3(%arg0: i32) -> (i32, i32) {
    %c0_i32 = arith.constant 0 : i32
    %c0_i32_0 = arith.constant 0 : i32
    %c0_i32_1 = arith.constant 0 : i32
    return %c0_i32, %c0_i32_0 : i32, i32
  }
  func.func @transform_4(%arg0: i32) -> (i32, i32) {
    %c0_i32 = arith.constant 0 : i32
    %c0_i32_0 = arith.constant 0 : i32
    %c0_i32_1 = arith.constant 0 : i32
    return %c0_i32, %c0_i32_0 : i32, i32
  }
}

</mosaic_0001>

<llo_original>
// kernel: _forward.1
$region0: #{_forward.1}
  #allocation0 [shape = 'u32[]', space=smem, size = 0x4, offset = 0x4, fixed_abs, tag = 'smem constant byte address 0x4 - core index']
  #allocation1 [shape = 'u32[144,128]{1,0:T(1,128)}', space=vmem, size = 0x12000, scoped, tag = 'internal scratch']
  %s0 = inlined_call_operand.vmem [shape: f32[8,1,128], index: 0, kind: input, shape index: {}]
  %s1 = inlined_call_operand.vmem [shape: f32[1,128], index: 1, kind: input, shape index: {}]
  %s2 = inlined_call_operand.hbm [shape: f32[128,128], index: 2, kind: input, shape index: {}]
  %s3 = inlined_call_operand.vmem [shape: f32[1,128], index: 3, kind: input, shape index: {}]
  %s4 = inlined_call_operand.vmem [shape: f32[1,128], index: 4, kind: output, shape index: {}]
  %s5 = sld [smem:[#allocation0]]
  $region30: #{_forward.1} parent=0
    _
  %s7 = ssub.s32 1, %s5
  %s8 = scalar_select 0, %s7, %s5
  $region1: #{_forward.1} parent=0
    #allocation2 [shape = 'u8[65536]{0}', space=vmem, size = 0x10000, scoped, tag = 'input window, operand 2, single buffered']
    #allocation3 [shape = 's32[1]{0}', space=sflag, size = 0x4, scoped, tag = 'scoped memory for _forward.1']
    %9 = vsyncpa [#allocation3], 0
    // Predicated region
    $region2: #{_forward.1} parent=1 // pred_check
      _
    $region3: #{_forward.1} parent=1 // pred_check_branch
      %11 = sbr.rel (0) target = $region5
    $region4: #{_forward.1} parent=1 // pred_region
      _
    $region5: #{_forward.1} parent=1 // pred_fallthru
      _
    // Predicated region
    $region6: #{_forward.1} parent=1 // pred_check
      _
    $region7: #{_forward.1} parent=1 // pred_check_branch
      %13 = sbr.rel (0) target = $region9
    $region8: #{_forward.1} parent=1 // pred_region
      _
    $region9: #{_forward.1} parent=1 // pred_fallthru
      _
    // Predicated region
    $region10: #{_forward.1} parent=1 // pred_check
      _
    $region11: #{_forward.1} parent=1 // pred_check_branch
      %15 = sbr.rel (0) target = $region13
    $region12: #{_forward.1} parent=1 // pred_region
      %s17 = ssub.s32 2048, 2048
      %18 = vsyncadd [#allocation3], %s17
      %s19 = sshll.u32 [#allocation2], 4
      %s20 = int_to_ptr.vmem [resolvable:$true] %s19
      %25 = dma.hbm_to_vmem [thread:$0]  %s2, 2048, %s20, [#allocation3], 128, 128, 8
    $region13: #{_forward.1} parent=1 // pred_fallthru
      _
    // Predicated region
    $region14: #{_forward.1} parent=1 // pred_check
      _
    $region15: #{_forward.1} parent=1 // pred_check_branch
      %27 = sbr.rel (0) target = $region17
    $region16: #{_forward.1} parent=1 // pred_region
      _
    $region17: #{_forward.1} parent=1 // pred_fallthru
      _
    // Predicated region
    $region18: #{_forward.1} parent=1 // pred_check
      _
    $region19: #{_forward.1} parent=1 // pred_check_branch
      %29 = sbr.rel (0) target = $region21
    $region20: #{_forward.1} parent=1 // pred_region
      %30 = dma.done [#allocation3], 2048
    $region21: #{_forward.1} parent=1 // pred_fallthru
      _
    %v31 = vld [vmem:[%s1] sm:$0x1]
    %v32 = vld [vmem:[%s0] sm:$0x1]
    %v33 = vld [vmem:[%s0 + $0x1] sm:$0x1]
    %v34 = vld [vmem:[%s0 + $0x2] sm:$0x1]
    %v35 = vld [vmem:[%s0 + $0x3] sm:$0x1]
    %v36 = vld [vmem:[%s0 + $0x4] sm:$0x1]
    %v37 = vld [vmem:[%s0 + $0x5] sm:$0x1]
    %v38 = vld [vmem:[%s0 + $0x6] sm:$0x1]
    %v39 = vld [vmem:[%s0 + $0x7] sm:$0x1]
    %v40 = vadd.f32 %v32, %v33
    %v41 = vadd.f32 %v34, %v35
    %v42 = vadd.f32 %v36, %v37
    %v43 = vadd.f32 %v38, %v39
    %v44 = vsub.f32 %v40, %v31
    %v45 = vsub.f32 %v41, %v31
    %v46 = vsub.f32 %v42, %v31
    %v47 = vsub.f32 %v43, %v31
    %v48 = vsub.f32 %v32, %v31
    %v49 = vsub.f32 %v34, %v31
    %v50 = vsub.f32 %v36, %v31
    %v51 = vsub.f32 %v38, %v31
    %v52 = vsub.f32 %v33, %v31
    %v53 = vsub.f32 %v35, %v31
    %v54 = vsub.f32 %v37, %v31
    %v55 = vsub.f32 %v39, %v31
    %v56 = vmul.f32 %v48, %v52
    %v57 = vmul.f32 %v49, %v53
    %v58 = vmul.f32 %v50, %v54
    %v59 = vmul.f32 %v51, %v55
    %vm60 = vcmp.lt.f32.partialorder %v56, 0.0
    %vm61 = vcmp.lt.f32.partialorder %v57, 0.0
    %vm62 = vcmp.lt.f32.partialorder %v58, 0.0
    %vm63 = vcmp.lt.f32.partialorder %v59, 0.0
    %v64 = vmin.f32 %v32, %v33
    %v65 = vmin.f32 %v34, %v35
    %v66 = vmin.f32 %v36, %v37
    %v67 = vmin.f32 %v38, %v39
    %v68 = vmax.f32 %v44, 0.0
    %v69 = vmax.f32 %v45, 0.0
    %v70 = vmax.f32 %v46, 0.0
    %v71 = vmax.f32 %v47, 0.0
    %v72 = vmin.f32 %v68, 1.0
    %v73 = vmin.f32 %v69, 1.0
    %v74 = vmin.f32 %v70, 1.0
    %v75 = vmin.f32 %v71, 1.0
    %v76 = vsel %vm60, %v64, %v72
    %v77 = vsel %vm61, %v65, %v73
    %v78 = vsel %vm62, %v66, %v74
    %v79 = vsel %vm63, %v67, %v75
    %v80 = vadd.f32 %v76, %v77
    %v81 = vadd.f32 %v78, %v79
    %v82 = vsub.f32 %v80, %v31
    %v83 = vsub.f32 %v81, %v31
    %v84 = vsub.f32 %v76, %v31
    %v85 = vsub.f32 %v78, %v31
    %v86 = vsub.f32 %v77, %v31
    %v87 = vsub.f32 %v79, %v31
    %v88 = vmul.f32 %v84, %v86
    %v89 = vmul.f32 %v85, %v87
    %vm90 = vcmp.lt.f32.partialorder %v88, 0.0
    %vm91 = vcmp.lt.f32.partialorder %v89, 0.0
    %v92 = vmin.f32 %v76, %v77
    %v93 = vmin.f32 %v78, %v79
    %v94 = vmax.f32 %v82, 0.0
    %v95 = vmax.f32 %v83, 0.0
    %v96 = vmin.f32 %v94, 1.0
    %v97 = vmin.f32 %v95, 1.0
    %v98 = vsel %vm90, %v92, %v96
    %v99 = vsel %vm91, %v93, %v97
    %v100 = vadd.f32 %v98, %v99
    %v101 = vsub.f32 %v100, %v31
    %v102 = vsub.f32 %v98, %v31
    %v103 = vsub.f32 %v99, %v31
    %v104 = vmul.f32 %v102, %v103
    %vm105 = vcmp.lt.f32.partialorder %v104, 0.0
    %v106 = vmin.f32 %v98, %v99
    %v107 = vmax.f32 %v101, 0.0
    %v108 = vmin.f32 %v107, 1.0
    %v109 = vsel %vm105, %v106, %v108
    %v110 = vld [vmem:[#allocation2] sm:$0xff]
    %v111 = vld [vmem:[#allocation2 + $0x8] sm:$0xff]
    %v112 = vld [vmem:[#allocation2 + $0x10] sm:$0xff]
    %v113 = vld [vmem:[#allocation2 + $0x18] sm:$0xff]
    %v114 = vld [vmem:[#allocation2 + $0x20] sm:$0xff]
    %v115 = vld [vmem:[#allocation2 + $0x28] sm:$0xff]
    %v116 = vld [vmem:[#allocation2 + $0x30] sm:$0xff]
    %v117 = vld [vmem:[#allocation2 + $0x38] sm:$0xff]
    %v118 = vld [vmem:[#allocation2 + $0x40] sm:$0xff]
    %v119 = vld [vmem:[#allocation2 + $0x48] sm:$0xff]
    %v120 = vld [vmem:[#allocation2 + $0x50] sm:$0xff]
    %v121 = vld [vmem:[#allocation2 + $0x58] sm:$0xff]
    %v122 = vld [vmem:[#allocation2 + $0x60] sm:$0xff]
    %v123 = vld [vmem:[#allocation2 + $0x68] sm:$0xff]
    %v124 = vld [vmem:[#allocation2 + $0x70] sm:$0xff]
    %v125 = vld [vmem:[#allocation2 + $0x78] sm:$0xff]
    %v126 = vld [vmem:[%s3] sm:$0x1]
    %127 = vmatprep.subr.mxu0 0.0
    %128 = vmatpush1.msra.mxu0 %v125
    %129 = vmatprep.subr.mxu0 0.0
    %130 = vmatpush1.msra.mxu0 %v124
    %131 = vmatprep.subr.mxu0 0.0
    %132 = vmatpush1.msra.mxu0 %v123
    %133 = vmatprep.subr.mxu0 0.0
    %134 = vmatpush1.msra.mxu0 %v122
    %135 = vmatprep.subr.mxu0 0.0
    %136 = vmatpush1.msra.mxu0 %v121
    %137 = vmatprep.subr.mxu0 0.0
    %138 = vmatpush1.msra.mxu0 %v120
    %139 = vmatprep.subr.mxu0 0.0
    %140 = vmatpush1.msra.mxu0 %v119
    %141 = vmatprep.subr.mxu0 0.0
    %142 = vmatpush1.msra.mxu0 %v118
    %143 = vmatprep.subr.mxu0 0.0
    %144 = vmatpush1.msra.mxu0 %v117
    %145 = vmatprep.subr.mxu0 0.0
    %146 = vmatpush1.msra.mxu0 %v116
    %147 = vmatprep.subr.mxu0 0.0
    %148 = vmatpush1.msra.mxu0 %v115
    %149 = vmatprep.subr.mxu0 0.0
    %150 = vmatpush1.msra.mxu0 %v114
    %151 = vmatprep.subr.mxu0 0.0
    %152 = vmatpush1.msra.mxu0 %v113
    %153 = vmatprep.subr.mxu0 0.0
    %154 = vmatpush1.msra.mxu0 %v112
    %155 = vmatprep.subr.mxu0 0.0
    %156 = vmatpush1.msra.mxu0 %v111
    %157 = vmatprep.subr.mxu0 0.0
    %158 = vmatpush1.msra.mxu0 %v110
    %159 = vmatprep.subr.mxu0 0.0
    %160 = vmatpush2.msra.mxu0 0.0
    %161 = vmatprep.subr.mxu0 0.0
    %162 = vmatpush2.msra.mxu0 0.0
    %163 = vmatprep.subr.mxu0 0.0
    %164 = vmatpush2.msra.mxu0 0.0
    %165 = vmatprep.subr.mxu0 0.0
    %166 = vmatpush2.msra.mxu0 0.0
    %167 = vmatprep.subr.mxu0 0.0
    %168 = vmatpush2.msra.mxu0 0.0
    %169 = vmatprep.subr.mxu0 0.0
    %170 = vmatpush2.msra.mxu0 0.0
    %171 = vmatprep.subr.mxu0 0.0
    %172 = vmatpush2.msra.mxu0 0.0
    %173 = vmatprep.subr.mxu0 0.0
    %174 = vmatpush2.msra.mxu0 0.0
    %175 = vmatprep.subr.mxu0 0.0
    %176 = vmatpush2.msra.mxu0 0.0
    %177 = vmatprep.subr.mxu0 0.0
    %178 = vmatpush2.msra.mxu0 0.0
    %179 = vmatprep.subr.mxu0 0.0
    %180 = vmatpush2.msra.mxu0 0.0
    %181 = vmatprep.subr.mxu0 0.0
    %182 = vmatpush2.msra.mxu0 0.0
    %183 = vmatprep.subr.mxu0 0.0
    %184 = vmatpush2.msra.mxu0 0.0
    %185 = vmatprep.subr.mxu0 0.0
    %186 = vmatpush2.msra.mxu0 0.0
    %187 = vmatprep.subr.mxu0 0.0
    %188 = vmatpush2.msra.mxu0 0.0
    %189 = vmatprep.subr.mxu0 0.0
    %190 = vmatpush2.msra.mxu0 0.0
    %191 = vmatprep.mubr.f32.mxu0 0.0
    %192 = vmatmul.mubr.f32.gmra.mxu0 %v109
    %v193 = vpop.f32.mrf.mxu0
    %v194 = vadd.f32 %v126, %v193
    %v195 = vpop.f32.mrf.mxu0
    %196 = vdwg.mxu0
    %197 = vst [vmem:[%s4] sm:$0x1] %v194
    // Predicated region
    $region22: #{_forward.1} parent=1 // pred_check
      _
    $region23: #{_forward.1} parent=1 // pred_check_branch
      %199 = sbr.rel (0) target = $region25
    $region24: #{_forward.1} parent=1 // pred_region
      _
    $region25: #{_forward.1} parent=1 // pred_fallthru
      _
    // Predicated region
    $region26: #{_forward.1} parent=1 // pred_check
      _
    $region27: #{_forward.1} parent=1 // pred_check_branch
      %201 = sbr.rel (0) target = $region29
    $region28: #{_forward.1} parent=1 // pred_region
      _
    $region29: #{_forward.1} parent=1 // pred_fallthru
      _
    %202 = vsyncpa [#allocation3], 1

</llo_original>
